<compile_context>
chip_gen: v7x
topology: tpu7x:2x2x1
jax: 0.10.0
libtpu: 0.0.40
codegen_flags: <defaults>
</compile_context>

<pallas_src>
import jax
import jax.numpy as jnp
from jax.experimental import pallas as pl
from jax.experimental.pallas import tpu as pltpu


# ----------------------------------------------------------------------------
# Kernels
# ----------------------------------------------------------------------------
def _onehot_kernel(ids_ref, head_ref, table_ref, out_ref):
    # ids_ref   : VMEM [tb, 1] int32   relation ids for this batch tile
    # head_ref  : VMEM [tb, D]         head embeddings tile
    # table_ref : VMEM [R,  D]         full relation table (resident, 1 buffer)
    # out_ref   : VMEM [tb, D]
    ids = ids_ref[...]                                   # [tb, 1]
    tb = ids.shape[0]
    R = table_ref.shape[0]

    # One-hot gather on the MXU: one_hot[tb, R] @ table[R, D] -> [tb, D] f32.
    iota_r = jax.lax.broadcasted_iota(jnp.int32, (tb, R), 1)
    one_hot = (iota_r == ids).astype(table_ref.dtype)    # VPU compare + cast (exact)
    gathered = jnp.dot(one_hot, table_ref[...],
                       preferred_element_type=jnp.float32)

    # Single full-tile, lane-dense store; f32 accumulate then cast.
    out_ref[...] = (head_ref[...].astype(jnp.float32) + gathered).astype(out_ref.dtype)


_GATHER_WINDOW = 8   # max in-flight row DMAs per batch tile in the large-R path


def _gather_kernel(ids_ref, head_ref, table_hbm, out_ref, gbuf, sem):
    # ids_ref   : SMEM [B]      int32 (scalar-prefetched full id vector)
    # head_ref  : VMEM [tb, D]
    # table_hbm : HBM  [R,  D]  (memory_space=pl.ANY, gathered row by row)
    # out_ref   : VMEM [tb, D]
    # gbuf      : VMEM [tb, D]  scratch for gathered relation rows
    # sem       : DMA semaphore
    i = pl.program_id(0)
    tb = head_ref.shape[0]
    B = ids_ref.shape[0]

    def start_row(r):
        row = jnp.minimum(i * tb + r, B - 1)     # clamp ragged tail (rows dropped anyway)
        idx = ids_ref[row]
        pltpu.make_async_copy(table_hbm.at[pl.ds(idx, 1)],
                              gbuf.at[pl.ds(r, 1)], sem).start()

    w = min(_GATHER_WINDOW, tb)
    for r in range(w):                           # fill the DMA window (static prologue)
        start_row(r)

    @pl.loop(0, tb)
    def _(r):
        @pl.when(r + w < tb)
        def _():
            start_row(r + w)                     # keep the window full
        pltpu.make_async_copy(table_hbm.at[pl.ds(0, 1)],
                              gbuf.at[pl.ds(r, 1)], sem).wait()

    out_ref[...] = (head_ref[...].astype(jnp.float32)
                    + gbuf[...].astype(jnp.float32)).astype(out_ref.dtype)


# ----------------------------------------------------------------------------
# Wrapper
# ----------------------------------------------------------------------------
def _round_up(x, m):
    return ((x + m - 1) // m) * m


def _vmem_capacity_bytes():
    try:
        return int(pltpu.get_tpu_info().vmem_capacity_bytes)
    except Exception:
        return 64 * 1024 * 1024      # conservative default (v7x per-core VMEM)


def transe_score(head_embed, rel_ids, embed_table, *, tb=None, force_gather=False):
    """head_embed: [B, D], rel_ids: [B] int, embed_table: [R, D] -> [B, D]."""
    B, D = head_embed.shape
    R, D2 = embed_table.shape
    assert D == D2
    out_dtype = head_embed.dtype

    # Lane-dense output stores: pad D to a multiple of 128 only if needed
    # (typical D=128/256 TransE dims are untouched; padded columns sliced at end).
    Dp = _round_up(D, 128)
    if Dp != D:
        head_embed = jnp.pad(head_embed, ((0, 0), (0, Dp - D)))
        embed_table = jnp.pad(embed_table, ((0, 0), (0, Dp - D)))

    dsize = jnp.dtype(head_embed.dtype).itemsize
    tsize = jnp.dtype(embed_table.dtype).itemsize
    min_rows = max(8, 32 // dsize)               # sublane granularity: 8 f32 / 16 bf16

    vmem_cap = _vmem_capacity_bytes()
    vmem_budget = min(int(0.75 * vmem_cap), 96 * 1024 * 1024)   # headroom on all gens

    table_vmem_bytes = _round_up(R, 8) * Dp * tsize
    # Switch to the DMA row-gather path when the resident table would crowd VMEM.
    use_gather = bool(force_gather) or R >= 2048 or (2 * table_vmem_bytes > vmem_budget // 2)

    # ---- batch tile size: target ~2 MiB of head bytes per tile (HBM roofline) ----
    if tb is None:
        tb = (2 * 1024 * 1024) // max(1, Dp * dsize)
        tb = min(4096, tb)
    tb = max(min_rows, (tb // min_rows) * min_rows)
    # Keep at least two grid steps when the batch allows it (v7x has 2 TensorCores).
    if B > min_rows:
        tb = min(tb, _round_up(pl.cdiv(B, 2), min_rows))
    tb = min(tb, _round_up(B, min_rows))

    def tile_vmem_bytes(tb_):
        head_t = tb_ * Dp * dsize
        out_t = tb_ * Dp * dsize
        ids_t = 0 if use_gather else tb_ * 128 * 4     # (tb,1) i32 pads to 128 lanes
        gbuf_t = tb_ * Dp * tsize if use_gather else 0
        table_t = 0 if use_gather else 2 * table_vmem_bytes   # worst case 2 buffers
        return table_t + gbuf_t + 2 * (head_t + out_t + ids_t)

    while tb > min_rows and tile_vmem_bytes(tb) > vmem_budget:
        tb = max(min_rows, ((tb // 2) // min_rows) * min_rows)

    # Derive the scoped-VMEM limit from the actual buffers (not a hard-coded 32 MiB).
    vmem_limit = int(min(vmem_budget, max(2 * tile_vmem_bytes(tb), 32 * 1024 * 1024)))

    grid_b = pl.cdiv(B, tb)     # ragged last tile handled by Pallas (no jnp.pad / slice)

    if not use_gather:
        # ---------------- small-R: resident table, one-hot MXU gather ----------------
        ids_2d = rel_ids.astype(jnp.int32).reshape(B, 1)
        cost = pl.CostEstimate(
            flops=2 * B * R * Dp + B * Dp,
            transcendentals=0,
            bytes_accessed=2 * B * Dp * dsize + R * Dp * tsize + B * 4)

        def run(table_pipeline_mode):
            if table_pipeline_mode is None:
                table_spec = pl.BlockSpec((R, Dp), lambda i: (0, 0))
            else:
                table_spec = pl.BlockSpec((R, Dp), lambda i: (0, 0),
                                          pipeline_mode=table_pipeline_mode)
            return pl.pallas_call(
                _onehot_kernel,
                out_shape=jax.ShapeDtypeStruct((B, Dp), out_dtype),
                grid_spec=pltpu.PrefetchScalarGridSpec(
                    num_scalar_prefetch=0,
                    grid=(grid_b,),
                    in_specs=[
                        pl.BlockSpec((tb, 1), lambda i: (i, 0)),    # relation ids tile
                        pl.BlockSpec((tb, Dp), lambda i: (i, 0)),   # head tile
                        table_spec,                                 # resident table
                    ],
                    out_specs=pl.BlockSpec((tb, Dp), lambda i: (i, 0)),
                ),
                compiler_params=pltpu.CompilerParams(
                    dimension_semantics=("parallel",),   # shard batch tiles across TCs
                    vmem_limit_bytes=vmem_limit,
                ),
                cost_estimate=cost,
            )(ids_2d, head_embed, embed_table)

        try:
            # Single-buffer the constant-index resident table (halves its VMEM).
            out = run(pl.Buffered(1))
        except Exception:
            # pipeline_mode unsupported on this jax version -> default buffering.
            out = run(None)
    else:
        # ---------------- large-R: scalar-prefetched ids + HBM row gather ----------------
        ids_1d = rel_ids.astype(jnp.int32).reshape(B)
        cost = pl.CostEstimate(
            flops=B * Dp,
            transcendentals=0,
            bytes_accessed=2 * B * Dp * dsize + B * Dp * tsize + B * 4)
        out = pl.pallas_call(
            _gather_kernel,
            out_shape=jax.ShapeDtypeStruct((B, Dp), out_dtype),
            grid_spec=pltpu.PrefetchScalarGridSpec(
                num_scalar_prefetch=1,                        # ids -> SMEM
                grid=(grid_b,),
                in_specs=[
                    pl.BlockSpec((tb, Dp), lambda i, ids: (i, 0)),   # head tile
                    pl.BlockSpec(memory_space=pl.ANY),               # table stays in HBM
                ],
                out_specs=pl.BlockSpec((tb, Dp), lambda i, ids: (i, 0)),
                scratch_shapes=[
                    pltpu.VMEM((tb, Dp), embed_table.dtype),         # gathered rows
                    pltpu.SemaphoreType.DMA(()),
                ],
            ),
            compiler_params=pltpu.CompilerParams(
                dimension_semantics=("parallel",),
                vmem_limit_bytes=vmem_limit,
            ),
            cost_estimate=cost,
        )(ids_1d, head_embed, embed_table)

    if Dp != D:
        out = out[:, :D]
    return out


# ----------------------------------------------------------------------------
# Self-test
# ----------------------------------------------------------------------------
if __name__ == "__main__":
    # Small, deterministic synthetic setup.
    num_relations = 16
    embedding_dim = 128
    batch = 32

    key = jax.random.PRNGKey(0)
    k_head, k_ids, k_embed = jax.random.split(key, 3)

    head_embed = jax.random.normal(k_head, (batch, embedding_dim), dtype=jnp.float32)
    rel_ids = jax.random.randint(k_ids, (batch,), 0, num_relations, dtype=jnp.int32)
    # torch.nn.Embedding default init is N(0, 1); replicate deterministically.
    embed_table = jax.random.normal(k_embed, (num_relations, embedding_dim),
                                    dtype=jnp.float32)

    ref = head_embed + embed_table[rel_ids]

    # 1) Default auto-tiled one-hot path (tb chosen so grid_b >= 2).
    out = jax.block_until_ready(transe_score(head_embed, rel_ids, embed_table))
    assert out.shape == (batch, embedding_dim)
    assert jnp.allclose(out, ref, atol=1e-6, rtol=1e-6)

    # 2) Ragged batch (B=30, tb=8 -> 4 tiles, partial last tile, no wrapper pad/slice).
    out_r = jax.block_until_ready(
        transe_score(head_embed[:30], rel_ids[:30], embed_table, tb=8))
    assert jnp.allclose(out_r, ref[:30], atol=1e-6, rtol=1e-6)

    # 3) Large-R DMA row-gather path, forced at small scale to validate it.
    out_g = jax.block_until_ready(
        transe_score(head_embed[:30], rel_ids[:30], embed_table, tb=8,
                     force_gather=True))
    assert jnp.allclose(out_g, ref[:30], atol=1e-6, rtol=1e-6)

    print("KERNEL_OK")
</pallas_src>

<mosaic_0001>
module attributes {stable_mosaic.version = 11 : i64} {
  func.func @_onehot_kernel(%arg0: i32, %arg1: memref<16x1xi32, #tpu.memory_space<vmem>>, %arg2: memref<16x128xf32, #tpu.memory_space<vmem>>, %arg3: memref<16x128xf32, #tpu.memory_space<vmem>>, %arg4: memref<16x128xf32, #tpu.memory_space<vmem>>) attributes {dimension_semantics = [#tpu.dimension_semantics<parallel>], iteration_bounds = array<i64: 2>, scalar_prefetch = 0 : i64, scratch_operands = 0 : i64, tpu.core_type = #tpu.core_type<tc>, window_params = [{transform_indices = @transform_0, window_bounds = array<i64: 16, 1>}, {transform_indices = @transform_1, window_bounds = array<i64: 16, 128>}, {pipeline_mode = #tpu.pipeline_mode<synchronous>, transform_indices = @transform_2, window_bounds = array<i64: 16, 128>}, {transform_indices = @transform_3, window_bounds = array<i64: 16, 128>}]} {
    %c0 = arith.constant 0 : index
    %c0_0 = arith.constant 0 : index
    %0 = vector.load %arg1[%c0, %c0_0] : memref<16x1xi32, #tpu.memory_space<vmem>>, vector<16x1xi32>
    %1 = tpu.iota {dimensions = array<i32: 1>} : vector<16x16xi32>
    %2 = vector.broadcast %0 : vector<16x1xi32> to vector<16x16xi32>
    %3 = arith.cmpi eq, %1, %2 : vector<16x16xi32>
    %4 = arith.extui %3 : vector<16x16xi1> to vector<16x16xi32>
    %5 = arith.sitofp %4 : vector<16x16xi32> to vector<16x16xf32>
    %c0_1 = arith.constant 0 : index
    %c0_2 = arith.constant 0 : index
    %6 = vector.load %arg3[%c0_1, %c0_2] : memref<16x128xf32, #tpu.memory_space<vmem>>, vector<16x128xf32>
    %cst = arith.constant dense<0.000000e+00> : vector<16x128xf32>
    %7 = tpu.matmul %5, %6, %cst {dimension_numbers = #tpu.dot_dimension_numbers<[1], [0], [0], [1], [0, 0, 1, 1], [], []>} : vector<16x16xf32>, vector<16x128xf32>, vector<16x128xf32> -> vector<16x128xf32>
    %c0_3 = arith.constant 0 : index
    %c0_4 = arith.constant 0 : index
    %8 = vector.load %arg2[%c0_3, %c0_4] : memref<16x128xf32, #tpu.memory_space<vmem>>, vector<16x128xf32>
    %9 = arith.addf %8, %7 : vector<16x128xf32>
    %c0_5 = arith.constant 0 : index
    %c0_6 = arith.constant 0 : index
    %10 = vector.load %arg4[%c0_5, %c0_6] : memref<16x128xf32, #tpu.memory_space<vmem>>, vector<16x128xf32>
    tpu.vector_store %arg4[%c0_5, %c0_6], %9 {strides = array<i32>} : memref<16x128xf32, #tpu.memory_space<vmem>>, vector<16x128xf32>,
    return
  }
  func.func @transform_0(%arg0: i32) -> (i32, i32) {
    %c0_i32 = arith.constant 0 : i32
    %c0_i32_0 = arith.constant 0 : i32
    return %arg0, %c0_i32 : i32, i32
  }
  func.func @transform_1(%arg0: i32) -> (i32, i32) {
    %c0_i32 = arith.constant 0 : i32
    %c0_i32_0 = arith.constant 0 : i32
    return %arg0, %c0_i32 : i32, i32
  }
  func.func @transform_2(%arg0: i32) -> (i32, i32) {
    %c0_i32 = arith.constant 0 : i32
    %c0_i32_0 = arith.constant 0 : i32
    %c0_i32_1 = arith.constant 0 : i32
    return %c0_i32, %c0_i32_0 : i32, i32
  }
  func.func @transform_3(%arg0: i32) -> (i32, i32) {
    %c0_i32 = arith.constant 0 : i32
    %c0_i32_0 = arith.constant 0 : i32
    return %arg0, %c0_i32 : i32, i32
  }
}

module attributes {stable_mosaic.version = 11 : i64} {
  func.func @_onehot_kernel(%arg0: i32, %arg1: memref<16x1xi32, #tpu.memory_space<vmem>>, %arg2: memref<16x128xf32, #tpu.memory_space<vmem>>, %arg3: memref<16x128xf32, #tpu.memory_space<vmem>>, %arg4: memref<16x128xf32, #tpu.memory_space<vmem>>) attributes {dimension_semantics = [#tpu.dimension_semantics<parallel>], iteration_bounds = array<i64: 2>, scalar_prefetch = 0 : i64, scratch_operands = 0 : i64, tpu.core_type = #tpu.core_type<tc>, window_params = [{transform_indices = @transform_0, window_bounds = array<i64: 16, 1>}, {transform_indices = @transform_1, window_bounds = array<i64: 16, 128>}, {pipeline_mode = #tpu.pipeline_mode<synchronous>, transform_indices = @transform_2, window_bounds = array<i64: 16, 128>}, {transform_indices = @transform_3, window_bounds = array<i64: 16, 128>}]} {
    %c0 = arith.constant 0 : index
    %c0_0 = arith.constant 0 : index
    %0 = vector.load %arg1[%c0, %c0_0] : memref<16x1xi32, #tpu.memory_space<vmem>>, vector<16x1xi32>
    %1 = tpu.iota {dimensions = array<i32: 1>} : vector<16x16xi32>
    %2 = vector.broadcast %0 : vector<16x1xi32> to vector<16x16xi32>
    %3 = arith.cmpi eq, %1, %2 : vector<16x16xi32>
    %4 = arith.extui %3 : vector<16x16xi1> to vector<16x16xi32>
    %5 = arith.sitofp %4 : vector<16x16xi32> to vector<16x16xf32>
    %c0_1 = arith.constant 0 : index
    %c0_2 = arith.constant 0 : index
    %6 = vector.load %arg3[%c0_1, %c0_2] : memref<16x128xf32, #tpu.memory_space<vmem>>, vector<16x128xf32>
    %cst = arith.constant dense<0.000000e+00> : vector<16x128xf32>
    %7 = tpu.matmul %5, %6, %cst {dimension_numbers = #tpu.dot_dimension_numbers<[1], [0], [0], [1], [0, 0, 1, 1], [], []>} : vector<16x16xf32>, vector<16x128xf32>, vector<16x128xf32> -> vector<16x128xf32>
    %c0_3 = arith.constant 0 : index
    %c0_4 = arith.constant 0 : index
    %8 = vector.load %arg2[%c0_3, %c0_4] : memref<16x128xf32, #tpu.memory_space<vmem>>, vector<16x128xf32>
    %9 = arith.addf %8, %7 : vector<16x128xf32>
    %c0_5 = arith.constant 0 : index
    %c0_6 = arith.constant 0 : index
    %10 = vector.load %arg4[%c0_5, %c0_6] : memref<16x128xf32, #tpu.memory_space<vmem>>, vector<16x128xf32>
    tpu.vector_store %arg4[%c0_5, %c0_6], %9 {strides = array<i32>} : memref<16x128xf32, #tpu.memory_space<vmem>>, vector<16x128xf32>,
    return
  }
  func.func @transform_0(%arg0: i32) -> (i32, i32) {
    %c0_i32 = arith.constant 0 : i32
    %c0_i32_0 = arith.constant 0 : i32
    return %arg0, %c0_i32 : i32, i32
  }
  func.func @transform_1(%arg0: i32) -> (i32, i32) {
    %c0_i32 = arith.constant 0 : i32
    %c0_i32_0 = arith.constant 0 : i32
    return %arg0, %c0_i32 : i32, i32
  }
  func.func @transform_2(%arg0: i32) -> (i32, i32) {
    %c0_i32 = arith.constant 0 : i32
    %c0_i32_0 = arith.constant 0 : i32
    %c0_i32_1 = arith.constant 0 : i32
    return %c0_i32, %c0_i32_0 : i32, i32
  }
  func.func @transform_3(%arg0: i32) -> (i32, i32) {
    %c0_i32 = arith.constant 0 : i32
    %c0_i32_0 = arith.constant 0 : i32
    return %arg0, %c0_i32 : i32, i32
  }
}

</mosaic_0001>

<llo_original>
// kernel: tpu_custom_call.1
$region0: #{tpu_custom_call.1}
  #allocation0 [shape = 'u32[]', space=smem, size = 0x4, offset = 0x4, fixed_abs, tag = 'smem constant byte address 0x4 - core index']
  #allocation1 [shape = 'u32[144,128]{1,0:T(1,128)}', space=vmem, size = 0x12000, scoped, tag = 'internal scratch']
  %s0 = inlined_call_operand.vmem [shape: s32[32,1], index: 0, kind: input, shape index: {}]
  %s1 = inlined_call_operand.vmem [shape: f32[32,128], index: 1, kind: input, shape index: {}]
  %s2 = inlined_call_operand.hbm [shape: f32[16,128], index: 2, kind: input, shape index: {}]
  %s3 = inlined_call_operand.hbm [shape: f32[32,128], index: 3, kind: output, shape index: {}]
  %s4 = sld [smem:[#allocation0]]
  $region49: #{tpu_custom_call.1} parent=0
    _
  %s6 = ssub.s32 1, %s4
  %s7 = scalar_select 0, %s6, %s4
  $region1: #{tpu_custom_call.1} parent=0
    #allocation2 [shape = 'u8[8192]{0}', space=vmem, size = 0x2000, scoped, tag = 'input window, operand 2, single buffered']
    #allocation3 [shape = 's32[2]{0}', space=sflag, size = 0x8, scoped, tag = 'scoped memory for tpu_custom_call.1']
    #allocation4 [shape = 's32[2]{0}', space=sflag, size = 0x8, scoped, tag = 'scoped memory for tpu_custom_call.1']
    #allocation5 [shape = 'u8[16384]{0}', space=vmem, size = 0x4000, scoped, tag = 'output window, operand 0']
    %8 = vsyncpa [#allocation3], 0
    %9 = vsyncpa [#allocation4], 0
    %s10 = scalar_lea.sflag [#allocation4], 1
    %11 = vsyncpa %s10, 0
    loop: start=0, step=1, limit=4
    $region2: #{tpu_custom_call.1} parent=1 // loop_pre_header
      _
    $region3: #{tpu_custom_call.1} parent=1 // loop_header
      %s13 = sphi 0, %s17
      %p14 = scmp.ge.s32.totalorder %s13, 4
      %s23 = sphi 0, %s25
      %s26 = sphi 0, %s23
      %s27 = sphi 0, %s26
      %s43 = sphi 0, %s27
      %s49 = sphi 0, %s51
      %s52 = sphi 0, %s49
      %s53 = sphi 0, %s52
      %s69 = sphi 0, %s53
      %s73 = sphi 0, %s73
      %s75 = sphi 0, %s73
      %s76 = sphi 0, %s75
      %s90 = sphi 0, %s76
      %s96 = sphi 0, %s98
      %s99 = sphi 0, %s96
      %s100 = sphi 0, %s99
      %s116 = sphi 0, %s100
    $region4: #{tpu_custom_call.1} parent=1 // loop_header_branch
      %16 = sbr.rel (%p14) target = $region8
    $region5: #{tpu_custom_call.1} parent=1 // loop_body
      %s18 = ssub.s32 %s13, 1
      %s19 = ssub.s32 %s13, 2
      %s20 = sadd.s32 %s13, 1
      %s21 = ssub.s32 %s13, %s20
      %p22 = scmp.eq.s32.totalorder %s21, 0
      %s24 = sadd.s32 %s23, 1
      %s25 = scalar_select %p22, %s23, %s24
      %p28 = pneg %p22
      %p29 = scmp.eq.s32.totalorder %s13, 1
      %p30 = por %p28, %p29
      %p31 = scmp.ne.s32.totalorder %s23, %s26
      %p32 = scmp.eq.s32.totalorder %s13, 0
      %p33 = por %p31, %p32
      %p34 = scmp.ne.s32.totalorder %s23, %s26
      %p35 = scmp.eq.s32.totalorder %s18, 1
      %p36 = por %p34, %p35
      %p37 = scmp.ne.s32.totalorder %s26, %s27
      %p38 = scmp.eq.s32.totalorder %s18, 0
      %p39 = por %p37, %p38
      %p40 = scmp.ne.s32.totalorder %s26, %s27
      %p41 = scmp.eq.s32.totalorder %s19, 1
      %p42 = por %p40, %p41
      %p44 = scmp.ne.s32.totalorder %s27, %s43
      %p45 = scmp.eq.s32.totalorder %s19, 0
      %p46 = por %p44, %p45
      %s47 = ssub.s32 %s13, %s20
      %p48 = scmp.eq.s32.totalorder %s47, 0
      %s50 = sadd.s32 %s49, 1
      %s51 = scalar_select %p48, %s49, %s50
      %p54 = pneg %p48
      %p55 = scmp.eq.s32.totalorder %s13, 1
      %p56 = por %p54, %p55
      %p57 = scmp.ne.s32.totalorder %s49, %s52
      %p58 = scmp.eq.s32.totalorder %s13, 0
      %p59 = por %p57, %p58
      %p60 = scmp.ne.s32.totalorder %s49, %s52
      %p61 = scmp.eq.s32.totalorder %s18, 1
      %p62 = por %p60, %p61
      %p63 = scmp.ne.s32.totalorder %s52, %s53
      %p64 = scmp.eq.s32.totalorder %s18, 0
      %p65 = por %p63, %p64
      %p66 = scmp.ne.s32.totalorder %s52, %s53
      %p67 = scmp.eq.s32.totalorder %s19, 1
      %p68 = por %p66, %p67
      %p70 = scmp.ne.s32.totalorder %s53, %s69
      %p71 = scmp.eq.s32.totalorder %s19, 0
      %p72 = por %p70, %p71
      %s74 = sadd.s32 %s73, 1
      %p77 = scmp.eq.s32.totalorder %s13, 1
      %p78 = scmp.ne.s32.totalorder %s73, %s75
      %p79 = scmp.eq.s32.totalorder %s13, 0
      %p80 = por %p78, %p79
      %p81 = scmp.ne.s32.totalorder %s73, %s75
      %p82 = scmp.eq.s32.totalorder %s18, 1
      %p83 = por %p81, %p82
      %p84 = scmp.ne.s32.totalorder %s75, %s76
      %p85 = scmp.eq.s32.totalorder %s18, 0
      %p86 = por %p84, %p85
      %p87 = scmp.ne.s32.totalorder %s75, %s76
      %p88 = scmp.eq.s32.totalorder %s19, 1
      %p89 = por %p87, %p88
      %p91 = scmp.ne.s32.totalorder %s76, %s90
      %p92 = scmp.eq.s32.totalorder %s19, 0
      %p93 = por %p91, %p92
      %s94 = ssub.s32 %s13, %s20
      %p95 = scmp.eq.s32.totalorder %s94, 0
      %s97 = sadd.s32 %s96, 1
      %s98 = scalar_select %p95, %s96, %s97
      %p101 = pneg %p95
      %p102 = scmp.eq.s32.totalorder %s13, 1
      %p103 = por %p101, %p102
      %p104 = scmp.ne.s32.totalorder %s96, %s99
      %p105 = scmp.eq.s32.totalorder %s13, 0
      %p106 = por %p104, %p105
      %p107 = scmp.ne.s32.totalorder %s96, %s99
      %p108 = scmp.eq.s32.totalorder %s18, 1
      %p109 = por %p107, %p108
      %p110 = scmp.ne.s32.totalorder %s99, %s100
      %p111 = scmp.eq.s32.totalorder %s18, 0
      %p112 = por %p110, %p111
      %p113 = scmp.ne.s32.totalorder %s99, %s100
      %p114 = scmp.eq.s32.totalorder %s19, 1
      %p115 = por %p113, %p114
      %p117 = scmp.ne.s32.totalorder %s100, %s116
      %p118 = scmp.eq.s32.totalorder %s19, 0
      %p119 = por %p117, %p118
      %p120 = scmp.le.s32.totalorder 1, %s13
      %p121 = scmp.lt.s32.totalorder %s13, 3
      %p122 = pnand %p120, %p121
      %p123 = pneg %p122
      // Predicated region
      $region9: #{tpu_custom_call.1} parent=5 // pred_check
        _
      $region10: #{tpu_custom_call.1} parent=5 // pred_check_branch
        %125 = sbr.rel (%p122) target = $region12
      $region11: #{tpu_custom_call.1} parent=5 // pred_region
        %s126 = ssub.s32 %s13, 1
        // Predicated region
        $region13: #{tpu_custom_call.1} parent=11 // pred_check
          %p127 = pneg %p86
        $region14: #{tpu_custom_call.1} parent=11 // pred_check_branch
          %129 = sbr.rel (%p127) target = $region16
        $region15: #{tpu_custom_call.1} parent=11 // pred_region
          %s131 = ssub.s32 256, 256
          %132 = vsyncadd [#allocation3], %s131
          %s133 = sshll.u32 [#allocation2], 4
          %s134 = int_to_ptr.vmem [resolvable:$true] %s133
          %139 = dma.hbm_to_vmem [thread:$0]  %s2, 256, %s134, [#allocation3], 128, 128, 8
        $region16: #{tpu_custom_call.1} parent=11 // pred_fallthru
          _
      $region12: #{tpu_custom_call.1} parent=5 // pred_fallthru
        _
      %p140 = scmp.lt.s32.totalorder %s13, 2
      // Predicated region
      $region17: #{tpu_custom_call.1} parent=5 // pred_check
        %p141 = pneg %p140
      $region18: #{tpu_custom_call.1} parent=5 // pred_check_branch
        %143 = sbr.rel (%p141) target = $region20
      $region19: #{tpu_custom_call.1} parent=5 // pred_region
        // Predicated region
        $region21: #{tpu_custom_call.1} parent=19 // pred_check
          %p144 = pneg %p33
        $region22: #{tpu_custom_call.1} parent=19 // pred_check_branch
          %146 = sbr.rel (%p144) target = $region24
        $region23: #{tpu_custom_call.1} parent=19 // pred_region
          %s147 = smul.u32 2, %s13
          %p148 = scmp.lt.s32.totalorder %s147, 3
          %s149 = scalar_select %p148, %s147, 3
          %s150 = smul.addr %s149, 8
          %s151 = scalar_lea.vmem %s0, %s150
          %s152 = smul.u32 2, %s13
        $region24: #{tpu_custom_call.1} parent=19 // pred_fallthru
          _
        // Predicated region
        $region25: #{tpu_custom_call.1} parent=19 // pred_check
          %p153 = pneg %p59
        $region26: #{tpu_custom_call.1} parent=19 // pred_check_branch
          %155 = sbr.rel (%p153) target = $region28
        $region27: #{tpu_custom_call.1} parent=19 // pred_region
          %s156 = smul.u32 2, %s13
          %p157 = scmp.lt.s32.totalorder %s156, 3
          %s158 = scalar_select %p157, %s156, 3
          %s159 = smul.addr %s158, 8
          %s160 = scalar_lea.vmem %s1, %s159
          %s161 = smul.u32 2, %s13
        $region28: #{tpu_custom_call.1} parent=19 // pred_fallthru
          _
      $region20: #{tpu_custom_call.1} parent=5 // pred_fallthru
        _
      %p162 = scmp.le.s32.totalorder 1, %s13
      %p163 = scmp.lt.s32.totalorder %s13, 3
      %p164 = pnand %p162, %p163
      %p165 = pneg %p164
      // Predicated region
      $region29: #{tpu_custom_call.1} parent=5 // pred_check
        _
      $region30: #{tpu_custom_call.1} parent=5 // pred_check_branch
        %167 = sbr.rel (%p164) target = $region32
      $region31: #{tpu_custom_call.1} parent=5 // pred_region
        %s168 = ssub.s32 %s13, 1
        // Predicated region
        $region33: #{tpu_custom_call.1} parent=31 // pred_check
          %p169 = pneg %p86
        $region34: #{tpu_custom_call.1} parent=31 // pred_check_branch
          %171 = sbr.rel (%p169) target = $region36
        $region35: #{tpu_custom_call.1} parent=31 // pred_region
          %172 = dma.done [#allocation3], 256
        $region36: #{tpu_custom_call.1} parent=31 // pred_fallthru
          _
        %s173 = smul.u32 2, %s18
        %p174 = scmp.lt.s32.totalorder %s173, 3
        %s175 = scalar_select %p174, %s173, 3
        %s176 = smul.addr %s175, 8
        %s177 = scalar_lea.vmem %s0, %s176
        %p178 = pneg %p39
        %p179 = pneg %p36
        %s180 = smul.u32 2, %s18
        %p181 = scmp.lt.s32.totalorder %s180, 3
        %s182 = scalar_select %p181, %s180, 3
        %s183 = smul.addr %s182, 8
        %s184 = scalar_lea.vmem %s1, %s183
        %p185 = pneg %p65
        %p186 = pneg %p62
        %p187 = pneg %p86
        %p188 = pneg %p83
        %p189 = pneg %p112
        %p190 = pneg %p109
        %s191 = sand.u32 %s99, 1
        %s192 = scalar_lea.sflag [#allocation4], %s191
        %s193 = sand.u32 %s99, 1
        %s194 = smul.addr %s193, 16
        %s195 = scalar_lea.vmem [#allocation5], %s194
        %s196 = smul.u32 2, %s18
        %p197 = scmp.lt.s32.totalorder %s196, 3
        %s198 = scalar_select %p197, %s196, 3
        %s199 = smul.addr %s198, 8
        %s200 = scalar_lea.vmem %s0, %s199
        %s201 = smul.u32 2, %s18
        %s202 = smul.u32 2, %s18
        %p203 = scmp.lt.s32.totalorder %s202, 3
        %s204 = scalar_select %p203, %s202, 3
        %s205 = smul.addr %s204, 8
        %s206 = scalar_lea.vmem %s1, %s205
        %s207 = smul.u32 2, %s18
        %s208 = smul.u32 2, %s18
        %v209 = vld [vmem:[%s200] sm:$0xff]
        %v210 = vld [vmem:[%s200 + $0x8] sm:$0xff]
        %v211 = vlaneseq
        %v212 = vand.u32 %v211, 127
        %213 = vset.pattern.permute.xlu0 0
        %214 = vperm.xlu0 %213, %v209
        %v215 = vpop.permute.xlu0 %214
        %216 = vset.pattern.permute.xlu0 0
        %217 = vperm.xlu0 %216, %v210
        %v218 = vpop.permute.xlu0 %217
        %vm219 = vcmp.eq.s32.totalorder %v212, %v215
        %vm220 = vcmp.eq.s32.totalorder %v212, %v218
        %v221 = vsel %vm219, 1, 0
        %v222 = vsel %vm220, 1, 0
        %v223 = vcvt.s32.f32 %v221
        %v224 = vcvt.s32.f32 %v222
        %v225 = vld [vmem:[#allocation2] sm:$0xff]
        %v226 = vld [vmem:[#allocation2 + $0x8] sm:$0xff]
        %vm227 = vcmask 130048
        %v229 = vsel %vm227, %v223, 0
        %v232 = vsel %vm227, %v224, 0
        %234 = vmatprep.subr.mxu0 0.0
        %235 = vmatpush1.msra.mxu0 %v225
        %236 = vmatprep.subr.mxu0 0.0
        %237 = vmatpush1.msra.mxu0 %v226
        %238 = vmatprep.subr.mxu0 0.0
        %239 = vmatpush1.msra.mxu0 0.0
        %240 = vmatprep.subr.mxu0 0.0
        %241 = vmatpush1.msra.mxu0 0.0
        %242 = vmatprep.subr.mxu0 0.0
        %243 = vmatpush1.msra.mxu0 0.0
        %244 = vmatprep.subr.mxu0 0.0
        %245 = vmatpush1.msra.mxu0 0.0
        %246 = vmatprep.subr.mxu0 0.0
        %247 = vmatpush1.msra.mxu0 0.0
        %248 = vmatprep.subr.mxu0 0.0
        %249 = vmatpush1.msra.mxu0 0.0
        %250 = vmatprep.subr.mxu0 0.0
        %251 = vmatpush1.msra.mxu0 0.0
        %252 = vmatprep.subr.mxu0 0.0
        %253 = vmatpush1.msra.mxu0 0.0
        %254 = vmatprep.subr.mxu0 0.0
        %255 = vmatpush1.msra.mxu0 0.0
        %256 = vmatprep.subr.mxu0 0.0
        %257 = vmatpush1.msra.mxu0 0.0
        %258 = vmatprep.subr.mxu0 0.0
        %259 = vmatpush1.msra.mxu0 0.0
        %260 = vmatprep.subr.mxu0 0.0
        %261 = vmatpush1.msra.mxu0 0.0
        %262 = vmatprep.subr.mxu0 0.0
        %263 = vmatpush1.msra.mxu0 0.0
        %264 = vmatprep.subr.mxu0 0.0
        %265 = vmatpush1.msra.mxu0 0.0
        %266 = vmatprep.subr.mxu0 0.0
        %267 = vmatpush1.msra.mxu0 0.0
        %268 = vmatprep.subr.mxu0 0.0
        %269 = vmatpush1.msra.mxu0 0.0
        %270 = vmatprep.subr.mxu0 0.0
        %271 = vmatpush1.msra.mxu0 0.0
        %272 = vmatprep.subr.mxu0 0.0
        %273 = vmatpush1.msra.mxu0 0.0
        %274 = vmatprep.subr.mxu0 0.0
        %275 = vmatpush1.msra.mxu0 0.0
        %276 = vmatprep.subr.mxu0 0.0
        %277 = vmatpush1.msra.mxu0 0.0
        %278 = vmatprep.subr.mxu0 0.0
        %279 = vmatpush1.msra.mxu0 0.0
        %280 = vmatprep.subr.mxu0 0.0
        %281 = vmatpush1.msra.mxu0 0.0
        %282 = vmatprep.subr.mxu0 0.0
        %283 = vmatpush1.msra.mxu0 0.0
        %284 = vmatprep.subr.mxu0 0.0
        %285 = vmatpush1.msra.mxu0 0.0
        %286 = vmatprep.subr.mxu0 0.0
        %287 = vmatpush1.msra.mxu0 0.0
        %288 = vmatprep.subr.mxu0 0.0
        %289 = vmatpush1.msra.mxu0 0.0
        %290 = vmatprep.subr.mxu0 0.0
        %291 = vmatpush1.msra.mxu0 0.0
        %292 = vmatprep.subr.mxu0 0.0
        %293 = vmatpush1.msra.mxu0 0.0
        %294 = vmatprep.subr.mxu0 0.0
        %295 = vmatpush1.msra.mxu0 0.0
        %296 = vmatprep.subr.mxu0 0.0
        %297 = vmatpush1.msra.mxu0 0.0
        %298 = vmatprep.mubr.f32.mxu0 0.0
        %299 = vmatmul.mubr.f32.gmra.mrb[0].mxu0 %v229
        %v300 = vpop.f32.mrb[0].mxu0
        %v301 = vadd.f32 0.0, %v300
        %v302 = vpop.f32.mrb[0].mxu0
        %303 = vmatprep.mubr.f32.mxu0 0.0
        %304 = vmatmul.mubr.f32.gmra.mrb[0].mxu0 %v232
        %v305 = vpop.f32.mrb[0].mxu0
        %v306 = vadd.f32 0.0, %v305
        %v307 = vpop.f32.mrb[0].mxu0
        %308 = vdwg.mxu0
        %v309 = vld [vmem:[%s206] sm:$0xff]
        %v310 = vld [vmem:[%s206 + $0x8] sm:$0xff]
        %v311 = vadd.f32 %v309, %v301
        %v312 = vadd.f32 %v310, %v306
        %313 = vst [vmem:[%s195] sm:$0xff] %v311
        %314 = vst [vmem:[%s195 + $0x8] sm:$0xff] %v312
        %s315 = sand.u32 %s99, 1
        %s316 = scalar_lea.sflag [#allocation4], %s315
        %s317 = sand.u32 %s99, 1
        %s318 = smul.addr %s317, 16
        %s319 = scalar_lea.vmem [#allocation5], %s318
        // Predicated region
        $region37: #{tpu_custom_call.1} parent=31 // pred_check
          %p320 = pneg %p109
        $region38: #{tpu_custom_call.1} parent=31 // pred_check_branch
          %322 = sbr.rel (%p320) target = $region40
        $region39: #{tpu_custom_call.1} parent=31 // pred_region
          %s323 = smul.u32 2, %s18
          %s325 = ssub.s32 256, 256
          %326 = vsyncadd %s316, %s325
          %s327 = smul.addr %s323, 128
          %s328 = scalar_lea.hbm %s3, %s327
          %s329 = sshll.u32 %s319, 4
          %s330 = int_to_ptr.vmem [resolvable:$true] %s329
          %335 = dma.vmem_to_hbm [thread:$0]  %s330, 256, %s328, %s316, 128, 128, 8
        $region40: #{tpu_custom_call.1} parent=31 // pred_fallthru
          _
      $region32: #{tpu_custom_call.1} parent=5 // pred_fallthru
        _
      %p336 = scmp.le.s32.totalorder 2, %s13
      // Predicated region
      $region41: #{tpu_custom_call.1} parent=5 // pred_check
        %p337 = pneg %p336
      $region42: #{tpu_custom_call.1} parent=5 // pred_check_branch
        %339 = sbr.rel (%p337) target = $region44
      $region43: #{tpu_custom_call.1} parent=5 // pred_region
        %s340 = ssub.s32 %s13, 2
        // Predicated region
        $region45: #{tpu_custom_call.1} parent=43 // pred_check
          %p341 = pneg %p115
        $region46: #{tpu_custom_call.1} parent=43 // pred_check_branch
          %343 = sbr.rel (%p341) target = $region48
        $region47: #{tpu_custom_call.1} parent=43 // pred_region
          %s344 = sand.u32 %s100, 1
          %s345 = scalar_lea.sflag [#allocation4], %s344
          %s346 = sand.u32 %s100, 1
          %s347 = smul.addr %s346, 16
          %s348 = scalar_lea.vmem [#allocation5], %s347
          %349 = dma.done %s345, 256
        $region48: #{tpu_custom_call.1} parent=43 // pred_fallthru
          _
      $region44: #{tpu_custom_call.1} parent=5 // pred_fallthru
        _
    $region6: #{tpu_custom_call.1} parent=1 // loop_footer
      %s17 = sadd.s32 1, %s13
    $region7: #{tpu_custom_call.1} parent=1 // loop_footer_branch
      %12 = sbr.rel target = $region3
    $region8: #{tpu_custom_call.1} parent=1 // loop_exit
      _
    %350 = vsyncpa [#allocation3], 1
    %s351 = scalar_lea.sflag [#allocation3], 1
    %352 = vsyncpa %s351, 1
    %353 = vsyncpa [#allocation4], 1
    %s354 = scalar_lea.sflag [#allocation4], 1
    %355 = vsyncpa %s354, 1

// kernel: tpu_custom_call.1
$region0: #{tpu_custom_call.1}
  #allocation0 [shape = 'u32[]', space=smem, size = 0x4, offset = 0x4, fixed_abs, tag = 'smem constant byte address 0x4 - core index']
  #allocation1 [shape = 'u32[144,128]{1,0:T(1,128)}', space=vmem, size = 0x12000, scoped, tag = 'internal scratch']
  %s0 = inlined_call_operand.vmem [shape: s32[32,1], index: 0, kind: input, shape index: {}]
  %s1 = inlined_call_operand.vmem [shape: f32[32,128], index: 1, kind: input, shape index: {}]
  %s2 = inlined_call_operand.hbm [shape: f32[16,128], index: 2, kind: input, shape index: {}]
  %s3 = inlined_call_operand.hbm [shape: f32[32,128], index: 3, kind: output, shape index: {}]
  %s4 = sld [smem:[#allocation0]]
  $region49: #{tpu_custom_call.1} parent=0
    _
  %s6 = ssub.s32 1, %s4
  %s7 = scalar_select 0, %s6, %s4
  $region1: #{tpu_custom_call.1} parent=0
    #allocation2 [shape = 'u8[8192]{0}', space=vmem, size = 0x2000, scoped, tag = 'input window, operand 2, single buffered']
    #allocation3 [shape = 's32[2]{0}', space=sflag, size = 0x8, scoped, tag = 'scoped memory for tpu_custom_call.1']
    #allocation4 [shape = 's32[2]{0}', space=sflag, size = 0x8, scoped, tag = 'scoped memory for tpu_custom_call.1']
    #allocation5 [shape = 'u8[16384]{0}', space=vmem, size = 0x4000, scoped, tag = 'output window, operand 0']
    %8 = vsyncpa [#allocation3], 0
    %9 = vsyncpa [#allocation4], 0
    %s10 = scalar_lea.sflag [#allocation4], 1
    %11 = vsyncpa %s10, 0
    loop: start=0, step=1, limit=4
    $region2: #{tpu_custom_call.1} parent=1 // loop_pre_header
      _
    $region3: #{tpu_custom_call.1} parent=1 // loop_header
      %s13 = sphi 0, %s17
      %p14 = scmp.ge.s32.totalorder %s13, 4
      %s23 = sphi 0, %s25
      %s26 = sphi 0, %s23
      %s27 = sphi 0, %s26
      %s43 = sphi 0, %s27
      %s49 = sphi 0, %s51
      %s52 = sphi 0, %s49
      %s53 = sphi 0, %s52
      %s69 = sphi 0, %s53
      %s73 = sphi 0, %s73
      %s75 = sphi 0, %s73
      %s76 = sphi 0, %s75
      %s90 = sphi 0, %s76
      %s96 = sphi 0, %s98
      %s99 = sphi 0, %s96
      %s100 = sphi 0, %s99
      %s116 = sphi 0, %s100
    $region4: #{tpu_custom_call.1} parent=1 // loop_header_branch
      %16 = sbr.rel (%p14) target = $region8
    $region5: #{tpu_custom_call.1} parent=1 // loop_body
      %s18 = ssub.s32 %s13, 1
      %s19 = ssub.s32 %s13, 2
      %s20 = sadd.s32 %s13, 1
      %s21 = ssub.s32 %s13, %s20
      %p22 = scmp.eq.s32.totalorder %s21, 0
      %s24 = sadd.s32 %s23, 1
      %s25 = scalar_select %p22, %s23, %s24
      %p28 = pneg %p22
      %p29 = scmp.eq.s32.totalorder %s13, 1
      %p30 = por %p28, %p29
      %p31 = scmp.ne.s32.totalorder %s23, %s26
      %p32 = scmp.eq.s32.totalorder %s13, 0
      %p33 = por %p31, %p32
      %p34 = scmp.ne.s32.totalorder %s23, %s26
      %p35 = scmp.eq.s32.totalorder %s18, 1
      %p36 = por %p34, %p35
      %p37 = scmp.ne.s32.totalorder %s26, %s27
      %p38 = scmp.eq.s32.totalorder %s18, 0
      %p39 = por %p37, %p38
      %p40 = scmp.ne.s32.totalorder %s26, %s27
      %p41 = scmp.eq.s32.totalorder %s19, 1
      %p42 = por %p40, %p41
      %p44 = scmp.ne.s32.totalorder %s27, %s43
      %p45 = scmp.eq.s32.totalorder %s19, 0
      %p46 = por %p44, %p45
      %s47 = ssub.s32 %s13, %s20
      %p48 = scmp.eq.s32.totalorder %s47, 0
      %s50 = sadd.s32 %s49, 1
      %s51 = scalar_select %p48, %s49, %s50
      %p54 = pneg %p48
      %p55 = scmp.eq.s32.totalorder %s13, 1
      %p56 = por %p54, %p55
      %p57 = scmp.ne.s32.totalorder %s49, %s52
      %p58 = scmp.eq.s32.totalorder %s13, 0
      %p59 = por %p57, %p58
      %p60 = scmp.ne.s32.totalorder %s49, %s52
      %p61 = scmp.eq.s32.totalorder %s18, 1
      %p62 = por %p60, %p61
      %p63 = scmp.ne.s32.totalorder %s52, %s53
      %p64 = scmp.eq.s32.totalorder %s18, 0
      %p65 = por %p63, %p64
      %p66 = scmp.ne.s32.totalorder %s52, %s53
      %p67 = scmp.eq.s32.totalorder %s19, 1
      %p68 = por %p66, %p67
      %p70 = scmp.ne.s32.totalorder %s53, %s69
      %p71 = scmp.eq.s32.totalorder %s19, 0
      %p72 = por %p70, %p71
      %s74 = sadd.s32 %s73, 1
      %p77 = scmp.eq.s32.totalorder %s13, 1
      %p78 = scmp.ne.s32.totalorder %s73, %s75
      %p79 = scmp.eq.s32.totalorder %s13, 0
      %p80 = por %p78, %p79
      %p81 = scmp.ne.s32.totalorder %s73, %s75
      %p82 = scmp.eq.s32.totalorder %s18, 1
      %p83 = por %p81, %p82
      %p84 = scmp.ne.s32.totalorder %s75, %s76
      %p85 = scmp.eq.s32.totalorder %s18, 0
      %p86 = por %p84, %p85
      %p87 = scmp.ne.s32.totalorder %s75, %s76
      %p88 = scmp.eq.s32.totalorder %s19, 1
      %p89 = por %p87, %p88
      %p91 = scmp.ne.s32.totalorder %s76, %s90
      %p92 = scmp.eq.s32.totalorder %s19, 0
      %p93 = por %p91, %p92
      %s94 = ssub.s32 %s13, %s20
      %p95 = scmp.eq.s32.totalorder %s94, 0
      %s97 = sadd.s32 %s96, 1
      %s98 = scalar_select %p95, %s96, %s97
      %p101 = pneg %p95
      %p102 = scmp.eq.s32.totalorder %s13, 1
      %p103 = por %p101, %p102
      %p104 = scmp.ne.s32.totalorder %s96, %s99
      %p105 = scmp.eq.s32.totalorder %s13, 0
      %p106 = por %p104, %p105
      %p107 = scmp.ne.s32.totalorder %s96, %s99
      %p108 = scmp.eq.s32.totalorder %s18, 1
      %p109 = por %p107, %p108
      %p110 = scmp.ne.s32.totalorder %s99, %s100
      %p111 = scmp.eq.s32.totalorder %s18, 0
      %p112 = por %p110, %p111
      %p113 = scmp.ne.s32.totalorder %s99, %s100
      %p114 = scmp.eq.s32.totalorder %s19, 1
      %p115 = por %p113, %p114
      %p117 = scmp.ne.s32.totalorder %s100, %s116
      %p118 = scmp.eq.s32.totalorder %s19, 0
      %p119 = por %p117, %p118
      %p120 = scmp.le.s32.totalorder 1, %s13
      %p121 = scmp.lt.s32.totalorder %s13, 3
      %p122 = pnand %p120, %p121
      %p123 = pneg %p122
      // Predicated region
      $region9: #{tpu_custom_call.1} parent=5 // pred_check
        _
      $region10: #{tpu_custom_call.1} parent=5 // pred_check_branch
        %125 = sbr.rel (%p122) target = $region12
      $region11: #{tpu_custom_call.1} parent=5 // pred_region
        %s126 = ssub.s32 %s13, 1
        // Predicated region
        $region13: #{tpu_custom_call.1} parent=11 // pred_check
          %p127 = pneg %p86
        $region14: #{tpu_custom_call.1} parent=11 // pred_check_branch
          %129 = sbr.rel (%p127) target = $region16
        $region15: #{tpu_custom_call.1} parent=11 // pred_region
          %s131 = ssub.s32 256, 256
          %132 = vsyncadd [#allocation3], %s131
          %s133 = sshll.u32 [#allocation2], 4
          %s134 = int_to_ptr.vmem [resolvable:$true] %s133
          %139 = dma.hbm_to_vmem [thread:$0]  %s2, 256, %s134, [#allocation3], 128, 128, 8
        $region16: #{tpu_custom_call.1} parent=11 // pred_fallthru
          _
      $region12: #{tpu_custom_call.1} parent=5 // pred_fallthru
        _
      %p140 = scmp.lt.s32.totalorder %s13, 2
      // Predicated region
      $region17: #{tpu_custom_call.1} parent=5 // pred_check
        %p141 = pneg %p140
      $region18: #{tpu_custom_call.1} parent=5 // pred_check_branch
        %143 = sbr.rel (%p141) target = $region20
      $region19: #{tpu_custom_call.1} parent=5 // pred_region
        // Predicated region
        $region21: #{tpu_custom_call.1} parent=19 // pred_check
          %p144 = pneg %p33
        $region22: #{tpu_custom_call.1} parent=19 // pred_check_branch
          %146 = sbr.rel (%p144) target = $region24
        $region23: #{tpu_custom_call.1} parent=19 // pred_region
          %s147 = smul.u32 2, %s13
          %p148 = scmp.lt.s32.totalorder %s147, 3
          %s149 = scalar_select %p148, %s147, 3
          %s150 = smul.addr %s149, 8
          %s151 = scalar_lea.vmem %s0, %s150
          %s152 = smul.u32 2, %s13
        $region24: #{tpu_custom_call.1} parent=19 // pred_fallthru
          _
        // Predicated region
        $region25: #{tpu_custom_call.1} parent=19 // pred_check
          %p153 = pneg %p59
        $region26: #{tpu_custom_call.1} parent=19 // pred_check_branch
          %155 = sbr.rel (%p153) target = $region28
        $region27: #{tpu_custom_call.1} parent=19 // pred_region
          %s156 = smul.u32 2, %s13
          %p157 = scmp.lt.s32.totalorder %s156, 3
          %s158 = scalar_select %p157, %s156, 3
          %s159 = smul.addr %s158, 8
          %s160 = scalar_lea.vmem %s1, %s159
          %s161 = smul.u32 2, %s13
        $region28: #{tpu_custom_call.1} parent=19 // pred_fallthru
          _
      $region20: #{tpu_custom_call.1} parent=5 // pred_fallthru
        _
      %p162 = scmp.le.s32.totalorder 1, %s13
      %p163 = scmp.lt.s32.totalorder %s13, 3
      %p164 = pnand %p162, %p163
      %p165 = pneg %p164
      // Predicated region
      $region29: #{tpu_custom_call.1} parent=5 // pred_check
        _
      $region30: #{tpu_custom_call.1} parent=5 // pred_check_branch
        %167 = sbr.rel (%p164) target = $region32
      $region31: #{tpu_custom_call.1} parent=5 // pred_region
        %s168 = ssub.s32 %s13, 1
        // Predicated region
        $region33: #{tpu_custom_call.1} parent=31 // pred_check
          %p169 = pneg %p86
        $region34: #{tpu_custom_call.1} parent=31 // pred_check_branch
          %171 = sbr.rel (%p169) target = $region36
        $region35: #{tpu_custom_call.1} parent=31 // pred_region
          %172 = dma.done [#allocation3], 256
        $region36: #{tpu_custom_call.1} parent=31 // pred_fallthru
          _
        %s173 = smul.u32 2, %s18
        %p174 = scmp.lt.s32.totalorder %s173, 3
        %s175 = scalar_select %p174, %s173, 3
        %s176 = smul.addr %s175, 8
        %s177 = scalar_lea.vmem %s0, %s176
        %p178 = pneg %p39
        %p179 = pneg %p36
        %s180 = smul.u32 2, %s18
        %p181 = scmp.lt.s32.totalorder %s180, 3
        %s182 = scalar_select %p181, %s180, 3
        %s183 = smul.addr %s182, 8
        %s184 = scalar_lea.vmem %s1, %s183
        %p185 = pneg %p65
        %p186 = pneg %p62
        %p187 = pneg %p86
        %p188 = pneg %p83
        %p189 = pneg %p112
        %p190 = pneg %p109
        %s191 = sand.u32 %s99, 1
        %s192 = scalar_lea.sflag [#allocation4], %s191
        %s193 = sand.u32 %s99, 1
        %s194 = smul.addr %s193, 16
        %s195 = scalar_lea.vmem [#allocation5], %s194
        %s196 = smul.u32 2, %s18
        %p197 = scmp.lt.s32.totalorder %s196, 3
        %s198 = scalar_select %p197, %s196, 3
        %s199 = smul.addr %s198, 8
        %s200 = scalar_lea.vmem %s0, %s199
        %s201 = smul.u32 2, %s18
        %s202 = smul.u32 2, %s18
        %p203 = scmp.lt.s32.totalorder %s202, 3
        %s204 = scalar_select %p203, %s202, 3
        %s205 = smul.addr %s204, 8
        %s206 = scalar_lea.vmem %s1, %s205
        %s207 = smul.u32 2, %s18
        %s208 = smul.u32 2, %s18
        %v209 = vld [vmem:[%s200] sm:$0xff]
        %v210 = vld [vmem:[%s200 + $0x8] sm:$0xff]
        %v211 = vlaneseq
        %v212 = vand.u32 %v211, 127
        %213 = vset.pattern.permute.xlu0 0
        %214 = vperm.xlu0 %213, %v209
        %v215 = vpop.permute.xlu0 %214
        %216 = vset.pattern.permute.xlu0 0
        %217 = vperm.xlu0 %216, %v210
        %v218 = vpop.permute.xlu0 %217
        %vm219 = vcmp.eq.s32.totalorder %v212, %v215
        %vm220 = vcmp.eq.s32.totalorder %v212, %v218
        %v221 = vsel %vm219, 1, 0
        %v222 = vsel %vm220, 1, 0
        %v223 = vcvt.s32.f32 %v221
        %v224 = vcvt.s32.f32 %v222
        %v225 = vld [vmem:[#allocation2] sm:$0xff]
        %v226 = vld [vmem:[#allocation2 + $0x8] sm:$0xff]
        %vm227 = vcmask 130048
        %v229 = vsel %vm227, %v223, 0
        %v232 = vsel %vm227, %v224, 0
        %234 = vmatprep.subr.mxu0 0.0
        %235 = vmatpush1.msra.mxu0 %v225
        %236 = vmatprep.subr.mxu0 0.0
        %237 = vmatpush1.msra.mxu0 %v226
        %238 = vmatprep.subr.mxu0 0.0
        %239 = vmatpush1.msra.mxu0 0.0
        %240 = vmatprep.subr.mxu0 0.0
        %241 = vmatpush1.msra.mxu0 0.0
        %242 = vmatprep.subr.mxu0 0.0
        %243 = vmatpush1.msra.mxu0 0.0
        %244 = vmatprep.subr.mxu0 0.0
        %245 = vmatpush1.msra.mxu0 0.0
        %246 = vmatprep.subr.mxu0 0.0
        %247 = vmatpush1.msra.mxu0 0.0
        %248 = vmatprep.subr.mxu0 0.0
        %249 = vmatpush1.msra.mxu0 0.0
        %250 = vmatprep.subr.mxu0 0.0
        %251 = vmatpush1.msra.mxu0 0.0
        %252 = vmatprep.subr.mxu0 0.0
        %253 = vmatpush1.msra.mxu0 0.0
        %254 = vmatprep.subr.mxu0 0.0
        %255 = vmatpush1.msra.mxu0 0.0
        %256 = vmatprep.subr.mxu0 0.0
        %257 = vmatpush1.msra.mxu0 0.0
        %258 = vmatprep.subr.mxu0 0.0
        %259 = vmatpush1.msra.mxu0 0.0
        %260 = vmatprep.subr.mxu0 0.0
        %261 = vmatpush1.msra.mxu0 0.0
        %262 = vmatprep.subr.mxu0 0.0
        %263 = vmatpush1.msra.mxu0 0.0
        %264 = vmatprep.subr.mxu0 0.0
        %265 = vmatpush1.msra.mxu0 0.0
        %266 = vmatprep.subr.mxu0 0.0
        %267 = vmatpush1.msra.mxu0 0.0
        %268 = vmatprep.subr.mxu0 0.0
        %269 = vmatpush1.msra.mxu0 0.0
        %270 = vmatprep.subr.mxu0 0.0
        %271 = vmatpush1.msra.mxu0 0.0
        %272 = vmatprep.subr.mxu0 0.0
        %273 = vmatpush1.msra.mxu0 0.0
        %274 = vmatprep.subr.mxu0 0.0
        %275 = vmatpush1.msra.mxu0 0.0
        %276 = vmatprep.subr.mxu0 0.0
        %277 = vmatpush1.msra.mxu0 0.0
        %278 = vmatprep.subr.mxu0 0.0
        %279 = vmatpush1.msra.mxu0 0.0
        %280 = vmatprep.subr.mxu0 0.0
        %281 = vmatpush1.msra.mxu0 0.0
        %282 = vmatprep.subr.mxu0 0.0
        %283 = vmatpush1.msra.mxu0 0.0
        %284 = vmatprep.subr.mxu0 0.0
        %285 = vmatpush1.msra.mxu0 0.0
        %286 = vmatprep.subr.mxu0 0.0
        %287 = vmatpush1.msra.mxu0 0.0
        %288 = vmatprep.subr.mxu0 0.0
        %289 = vmatpush1.msra.mxu0 0.0
        %290 = vmatprep.subr.mxu0 0.0
        %291 = vmatpush1.msra.mxu0 0.0
        %292 = vmatprep.subr.mxu0 0.0
        %293 = vmatpush1.msra.mxu0 0.0
        %294 = vmatprep.subr.mxu0 0.0
        %295 = vmatpush1.msra.mxu0 0.0
        %296 = vmatprep.subr.mxu0 0.0
        %297 = vmatpush1.msra.mxu0 0.0
        %298 = vmatprep.mubr.f32.mxu0 0.0
        %299 = vmatmul.mubr.f32.gmra.mrb[0].mxu0 %v229
        %v300 = vpop.f32.mrb[0].mxu0
        %v301 = vadd.f32 0.0, %v300
        %v302 = vpop.f32.mrb[0].mxu0
        %303 = vmatprep.mubr.f32.mxu0 0.0
        %304 = vmatmul.mubr.f32.gmra.mrb[0].mxu0 %v232
        %v305 = vpop.f32.mrb[0].mxu0
        %v306 = vadd.f32 0.0, %v305
        %v307 = vpop.f32.mrb[0].mxu0
        %308 = vdwg.mxu0
        %v309 = vld [vmem:[%s206] sm:$0xff]
        %v310 = vld [vmem:[%s206 + $0x8] sm:$0xff]
        %v311 = vadd.f32 %v309, %v301
        %v312 = vadd.f32 %v310, %v306
        %313 = vst [vmem:[%s195] sm:$0xff] %v311
        %314 = vst [vmem:[%s195 + $0x8] sm:$0xff] %v312
        %s315 = sand.u32 %s99, 1
        %s316 = scalar_lea.sflag [#allocation4], %s315
        %s317 = sand.u32 %s99, 1
        %s318 = smul.addr %s317, 16
        %s319 = scalar_lea.vmem [#allocation5], %s318
        // Predicated region
        $region37: #{tpu_custom_call.1} parent=31 // pred_check
          %p320 = pneg %p109
        $region38: #{tpu_custom_call.1} parent=31 // pred_check_branch
          %322 = sbr.rel (%p320) target = $region40
        $region39: #{tpu_custom_call.1} parent=31 // pred_region
          %s323 = smul.u32 2, %s18
          %s325 = ssub.s32 256, 256
          %326 = vsyncadd %s316, %s325
          %s327 = smul.addr %s323, 128
          %s328 = scalar_lea.hbm %s3, %s327
          %s329 = sshll.u32 %s319, 4
          %s330 = int_to_ptr.vmem [resolvable:$true] %s329
          %335 = dma.vmem_to_hbm [thread:$0]  %s330, 256, %s328, %s316, 128, 128, 8
        $region40: #{tpu_custom_call.1} parent=31 // pred_fallthru
          _
      $region32: #{tpu_custom_call.1} parent=5 // pred_fallthru
        _
      %p336 = scmp.le.s32.totalorder 2, %s13
      // Predicated region
      $region41: #{tpu_custom_call.1} parent=5 // pred_check
        %p337 = pneg %p336
      $region42: #{tpu_custom_call.1} parent=5 // pred_check_branch
        %339 = sbr.rel (%p337) target = $region44
      $region43: #{tpu_custom_call.1} parent=5 // pred_region
        %s340 = ssub.s32 %s13, 2
        // Predicated region
        $region45: #{tpu_custom_call.1} parent=43 // pred_check
          %p341 = pneg %p115
        $region46: #{tpu_custom_call.1} parent=43 // pred_check_branch
          %343 = sbr.rel (%p341) target = $region48
        $region47: #{tpu_custom_call.1} parent=43 // pred_region
          %s344 = sand.u32 %s100, 1
          %s345 = scalar_lea.sflag [#allocation4], %s344
          %s346 = sand.u32 %s100, 1
          %s347 = smul.addr %s346, 16
          %s348 = scalar_lea.vmem [#allocation5], %s347
          %349 = dma.done %s345, 256
        $region48: #{tpu_custom_call.1} parent=43 // pred_fallthru
          _
      $region44: #{tpu_custom_call.1} parent=5 // pred_fallthru
        _
    $region6: #{tpu_custom_call.1} parent=1 // loop_footer
      %s17 = sadd.s32 1, %s13
    $region7: #{tpu_custom_call.1} parent=1 // loop_footer_branch
      %12 = sbr.rel target = $region3
    $region8: #{tpu_custom_call.1} parent=1 // loop_exit
      _
    %350 = vsyncpa [#allocation3], 1
    %s351 = scalar_lea.sflag [#allocation3], 1
    %352 = vsyncpa %s351, 1
    %353 = vsyncpa [#allocation4], 1
    %s354 = scalar_lea.sflag [#allocation4], 1
    %355 = vsyncpa %s354, 1

</llo_original>
